<compile_context>
chip_gen: v5e
topology: v5e:2x2
jax: 0.10.0
libtpu: 0.0.40
codegen_flags: <defaults>
</compile_context>

<pallas_src>
import numpy as np
import jax
import jax.numpy as jnp
from jax import lax
from jax.experimental import pallas as pl
from jax.experimental.pallas import tpu as pltpu

# ----------------------------- problem sizes -----------------------------
NQ = 4               # nqubits
D = 2 ** NQ          # statevector dimension
L = 2                # number of parameterized layers; par_sizes = (L, NQ)
B = 16               # batch size for the demo run
TILE_B = 128         # batch tile on the lane axis (one grid step per tile)


# ------------------------------ Pallas kernel ----------------------------
def qlayer_kernel(x_ref, u_ref, o_ref):
    """x_ref: (NQ, TILE_B)  per-qubit encoding angles, batch on lanes (f32)
       u_ref: (D, D)        folded circuit unitary U_total (f32)
       o_ref: (NQ, TILE_B)  per-qubit Z expectations, batch on lanes (f32)"""
    x = x_ref[...]                                   # (NQ, TILE_B)
    c = jnp.cos(0.5 * x)                             # (NQ, TILE_B)  EUP
    s = jnp.sin(0.5 * x)

    # bit_q(statevector index) built in-kernel from iota — no constant DMAs.
    idx = lax.broadcasted_iota(jnp.int32, (D, 1), 0)                    # (D, 1)
    bits = [((idx >> (NQ - 1 - q)) & 1).astype(jnp.float32)             # (D, 1)
            for q in range(NQ)]

    # psi0^T[s, b] = prod_q (cos if bit_q(s)==0 else sin); init from q=0
    # (skips the multiply-by-ones).
    def amp(q):
        m = bits[q]                                                     # (D, 1)
        return c[q:q + 1, :] * (1.0 - m) + s[q:q + 1, :] * m            # (D, TILE_B)

    state = amp(0)
    for q in range(1, NQ):
        state = state * amp(q)

    # Single folded state update: U_total @ psi0^T.  N = TILE_B = 128 fills the
    # MXU lane dimension; explicit HIGHEST precision keeps the f32 path exact.
    state = jnp.dot(u_ref[...], state,
                    preferred_element_type=jnp.float32,
                    precision=lax.Precision.HIGHEST)                    # (D, TILE_B)

    probs = state * state                                               # (D, TILE_B)

    # <Z_q> = sum_s probs[s,:] * (1 - 2*bit_q(s)) — VPU multiply + XLU sublane
    # reduce per qubit (avoids a tiny second MXU dot; lane-dense 128-wide rows).
    for q in range(NQ):
        sign = 1.0 - 2.0 * bits[q]                                      # (D, 1)
        o_ref[q:q + 1, :] = jnp.sum(probs * sign, axis=0, keepdims=True)


# ------------------------- parameter / glue setup -------------------------
def _ry_mat(theta):
    c = jnp.cos(theta / 2.0)
    s = jnp.sin(theta / 2.0)
    return jnp.stack([jnp.stack([c, -s]), jnp.stack([s, c])])


def _cnot_ring_matrix(nq):
    d = 2 ** nq
    ring = np.eye(d, dtype=np.float32)
    for ctrl in range(nq):
        tgt = (ctrl + 1) % nq
        perm = np.arange(d)
        for st in range(d):
            if (st >> (nq - 1 - ctrl)) & 1:
                perm[st] = st ^ (1 << (nq - 1 - tgt))
        P = np.eye(d, dtype=np.float32)[perm]
        ring = P @ ring
    return jnp.asarray(ring)


def build_layer_unitaries(w):
    """w: (L, NQ) -> (L, D, D) real unitaries  U_l = CNOT_ring @ (⊗_q RY(w[l,q]))."""
    ring = _cnot_ring_matrix(NQ)
    us = []
    for l in range(w.shape[0]):
        U = _ry_mat(w[l, 0])
        for q in range(1, NQ):
            U = jnp.kron(U, _ry_mat(w[l, q]))
        us.append(ring @ U)
    return jnp.stack(us)                              # (L, D, D)


def build_total_unitary(w):
    """Fold all layers: U_total = U_{L-1} @ ... @ U_0  (D, D)."""
    us = build_layer_unitaries(w)
    total = jnp.eye(D, dtype=jnp.float32)
    for l in range(us.shape[0]):
        total = us[l] @ total
    return total


def qlayer_forward(x, w):
    """Pallas QLayer forward.  x: (B, NQ) float32, w: (L, NQ) float32 -> (B, NQ)."""
    b_in = x.shape[0]
    u_total = build_total_unitary(w)                                    # (D, D)

    # Batch on the lane axis, padded to a multiple of TILE_B (pad angles = 0 ->
    # valid |0..0> states, sliced away afterwards).
    bp = ((b_in + TILE_B - 1) // TILE_B) * TILE_B
    x_t = jnp.zeros((NQ, bp), jnp.float32).at[:, :b_in].set(x.astype(jnp.float32).T)

    out_t = pl.pallas_call(
        qlayer_kernel,
        out_shape=jax.ShapeDtypeStruct((NQ, bp), jnp.float32),
        grid_spec=pltpu.PrefetchScalarGridSpec(
            num_scalar_prefetch=0,
            grid=(bp // TILE_B,),
            in_specs=[
                pl.BlockSpec((NQ, TILE_B), lambda i: (0, i)),   # angle tiles, pipelined
                pl.BlockSpec((D, D), lambda i: (0, 0)),         # folded unitary, resident
            ],
            out_specs=pl.BlockSpec((NQ, TILE_B), lambda i: (0, i)),
        ),
        compiler_params=pltpu.CompilerParams(
            dimension_semantics=("parallel",)),                  # shards across TCs (v7x)
    )(x_t, u_total)

    return out_t[:, :b_in].T                                     # (B, NQ)


# jit the whole forward (kernel + host-side layer fold compiled/cached together).
qlayer_forward_jit = jax.jit(qlayer_forward)


# ------------------------------ JAX reference ------------------------------
def qlayer_reference(x, w):
    """Un-folded per-layer reference (also validates the host-side folding)."""
    u_all = build_layer_unitaries(w)
    s_idx = np.arange(D)[:, None]
    q_idx = np.arange(NQ)[None, :]
    zmat = jnp.asarray((1 - 2 * ((s_idx >> (NQ - 1 - q_idx)) & 1)).astype(np.float32))
    half = 0.5 * x
    c = jnp.cos(half)
    s = jnp.sin(half)
    idx = jnp.arange(D)
    state = jnp.ones((x.shape[0], D), jnp.float32)
    for q in range(NQ):
        bit = (idx >> (NQ - 1 - q)) & 1
        a = jnp.where(bit[None, :] == 0, c[:, q:q + 1], s[:, q:q + 1])
        state = state * a
    for l in range(L):
        state = state @ u_all[l].T
    probs = state * state
    return probs @ zmat


# ---------------------------------- main -----------------------------------
if __name__ == "__main__":
    key = jax.random.PRNGKey(0)
    kw, kx = jax.random.split(key)

    # self.w = Parameter(Normal(0, 1/sqrt(par_sizes[-1]))) with par_sizes = (L, NQ)
    w = jax.random.normal(kw, (L, NQ), dtype=jnp.float32) * (1.0 / np.sqrt(NQ))
    # input1: batch of per-qubit rotation angles
    x = jax.random.normal(kx, (B, NQ), dtype=jnp.float32)

    out = qlayer_forward_jit(x, w)
    out = jax.block_until_ready(out)

    ref = qlayer_reference(x, w)
    np.testing.assert_allclose(np.asarray(out), np.asarray(ref), rtol=1e-5, atol=1e-5)

    print("KERNEL_OK")
</pallas_src>

<mosaic_0001>
module attributes {stable_mosaic.version = 11 : i64} {
  func.func @qlayer_kernel(%arg0: i32, %arg1: memref<4x128xf32, #tpu.memory_space<vmem>>, %arg2: memref<16x16xf32, #tpu.memory_space<vmem>>, %arg3: memref<4x128xf32, #tpu.memory_space<vmem>>) attributes {dimension_semantics = [#tpu.dimension_semantics<parallel>], iteration_bounds = array<i64: 1>, scalar_prefetch = 0 : i64, scratch_operands = 0 : i64, tpu.core_type = #tpu.core_type<tc>, window_params = [{transform_indices = @transform_0, window_bounds = array<i64: 4, 128>}, {pipeline_mode = #tpu.pipeline_mode<synchronous>, transform_indices = @transform_1, window_bounds = array<i64: 16, 16>}, {transform_indices = @transform_2, window_bounds = array<i64: 4, 128>}]} {
    %c0 = arith.constant 0 : index
    %c0_0 = arith.constant 0 : index
    %0 = vector.load %arg1[%c0, %c0_0] : memref<4x128xf32, #tpu.memory_space<vmem>>, vector<4x128xf32>
    %cst = arith.constant 5.000000e-01 : f32
    %1 = vector.broadcast %cst : f32 to vector<4x128xf32>
    %2 = arith.mulf %1, %0 : vector<4x128xf32>
    %3 = math.cos %2 : vector<4x128xf32>
    %cst_1 = arith.constant 5.000000e-01 : f32
    %4 = vector.broadcast %cst_1 : f32 to vector<4x128xf32>
    %5 = arith.mulf %4, %0 : vector<4x128xf32>
    %6 = math.sin %5 : vector<4x128xf32>
    %7 = tpu.iota {dimensions = array<i32: 0>} : vector<16x1xi32>
    %c3_i32 = arith.constant 3 : i32
    %8 = vector.broadcast %c3_i32 : i32 to vector<16x1xi32>
    %9 = arith.shrsi %7, %8 : vector<16x1xi32>
    %c1_i32 = arith.constant 1 : i32
    %10 = vector.broadcast %c1_i32 : i32 to vector<16x1xi32>
    %11 = arith.andi %9, %10 : vector<16x1xi32>
    %12 = arith.sitofp %11 : vector<16x1xi32> to vector<16x1xf32>
    %c2_i32 = arith.constant 2 : i32
    %13 = vector.broadcast %c2_i32 : i32 to vector<16x1xi32>
    %14 = arith.shrsi %7, %13 : vector<16x1xi32>
    %c1_i32_2 = arith.constant 1 : i32
    %15 = vector.broadcast %c1_i32_2 : i32 to vector<16x1xi32>
    %16 = arith.andi %14, %15 : vector<16x1xi32>
    %17 = arith.sitofp %16 : vector<16x1xi32> to vector<16x1xf32>
    %c1_i32_3 = arith.constant 1 : i32
    %18 = vector.broadcast %c1_i32_3 : i32 to vector<16x1xi32>
    %19 = arith.shrsi %7, %18 : vector<16x1xi32>
    %c1_i32_4 = arith.constant 1 : i32
    %20 = vector.broadcast %c1_i32_4 : i32 to vector<16x1xi32>
    %21 = arith.andi %19, %20 : vector<16x1xi32>
    %22 = arith.sitofp %21 : vector<16x1xi32> to vector<16x1xf32>
    %c0_i32 = arith.constant 0 : i32
    %23 = vector.broadcast %c0_i32 : i32 to vector<16x1xi32>
    %24 = arith.shrsi %7, %23 : vector<16x1xi32>
    %c1_i32_5 = arith.constant 1 : i32
    %25 = vector.broadcast %c1_i32_5 : i32 to vector<16x1xi32>
    %26 = arith.andi %24, %25 : vector<16x1xi32>
    %27 = arith.sitofp %26 : vector<16x1xi32> to vector<16x1xf32>
    %28 = vector.extract_strided_slice %3 {offsets = [0, 0], sizes = [1, 128], strides = [1, 1]} : vector<4x128xf32> to vector<1x128xf32>
    %cst_6 = arith.constant 1.000000e+00 : f32
    %29 = vector.broadcast %cst_6 : f32 to vector<16x1xf32>
    %30 = arith.subf %29, %12 : vector<16x1xf32>
    %31 = vector.broadcast %28 : vector<1x128xf32> to vector<16x128xf32>
    %32 = vector.broadcast %30 : vector<16x1xf32> to vector<16x128xf32>
    %33 = arith.mulf %31, %32 : vector<16x128xf32>
    %34 = vector.extract_strided_slice %6 {offsets = [0, 0], sizes = [1, 128], strides = [1, 1]} : vector<4x128xf32> to vector<1x128xf32>
    %35 = vector.broadcast %34 : vector<1x128xf32> to vector<16x128xf32>
    %36 = vector.broadcast %12 : vector<16x1xf32> to vector<16x128xf32>
    %37 = arith.mulf %35, %36 : vector<16x128xf32>
    %38 = arith.addf %33, %37 : vector<16x128xf32>
    %39 = vector.extract_strided_slice %3 {offsets = [1, 0], sizes = [1, 128], strides = [1, 1]} : vector<4x128xf32> to vector<1x128xf32>
    %cst_7 = arith.constant 1.000000e+00 : f32
    %40 = vector.broadcast %cst_7 : f32 to vector<16x1xf32>
    %41 = arith.subf %40, %17 : vector<16x1xf32>
    %42 = vector.broadcast %39 : vector<1x128xf32> to vector<16x128xf32>
    %43 = vector.broadcast %41 : vector<16x1xf32> to vector<16x128xf32>
    %44 = arith.mulf %42, %43 : vector<16x128xf32>
    %45 = vector.extract_strided_slice %6 {offsets = [1, 0], sizes = [1, 128], strides = [1, 1]} : vector<4x128xf32> to vector<1x128xf32>
    %46 = vector.broadcast %45 : vector<1x128xf32> to vector<16x128xf32>
    %47 = vector.broadcast %17 : vector<16x1xf32> to vector<16x128xf32>
    %48 = arith.mulf %46, %47 : vector<16x128xf32>
    %49 = arith.addf %44, %48 : vector<16x128xf32>
    %50 = arith.mulf %38, %49 : vector<16x128xf32>
    %51 = vector.extract_strided_slice %3 {offsets = [2, 0], sizes = [1, 128], strides = [1, 1]} : vector<4x128xf32> to vector<1x128xf32>
    %cst_8 = arith.constant 1.000000e+00 : f32
    %52 = vector.broadcast %cst_8 : f32 to vector<16x1xf32>
    %53 = arith.subf %52, %22 : vector<16x1xf32>
    %54 = vector.broadcast %51 : vector<1x128xf32> to vector<16x128xf32>
    %55 = vector.broadcast %53 : vector<16x1xf32> to vector<16x128xf32>
    %56 = arith.mulf %54, %55 : vector<16x128xf32>
    %57 = vector.extract_strided_slice %6 {offsets = [2, 0], sizes = [1, 128], strides = [1, 1]} : vector<4x128xf32> to vector<1x128xf32>
    %58 = vector.broadcast %57 : vector<1x128xf32> to vector<16x128xf32>
    %59 = vector.broadcast %22 : vector<16x1xf32> to vector<16x128xf32>
    %60 = arith.mulf %58, %59 : vector<16x128xf32>
    %61 = arith.addf %56, %60 : vector<16x128xf32>
    %62 = arith.mulf %50, %61 : vector<16x128xf32>
    %63 = vector.extract_strided_slice %3 {offsets = [3, 0], sizes = [1, 128], strides = [1, 1]} : vector<4x128xf32> to vector<1x128xf32>
    %cst_9 = arith.constant 1.000000e+00 : f32
    %64 = vector.broadcast %cst_9 : f32 to vector<16x1xf32>
    %65 = arith.subf %64, %27 : vector<16x1xf32>
    %66 = vector.broadcast %63 : vector<1x128xf32> to vector<16x128xf32>
    %67 = vector.broadcast %65 : vector<16x1xf32> to vector<16x128xf32>
    %68 = arith.mulf %66, %67 : vector<16x128xf32>
    %69 = vector.extract_strided_slice %6 {offsets = [3, 0], sizes = [1, 128], strides = [1, 1]} : vector<4x128xf32> to vector<1x128xf32>
    %70 = vector.broadcast %69 : vector<1x128xf32> to vector<16x128xf32>
    %71 = vector.broadcast %27 : vector<16x1xf32> to vector<16x128xf32>
    %72 = arith.mulf %70, %71 : vector<16x128xf32>
    %73 = arith.addf %68, %72 : vector<16x128xf32>
    %74 = arith.mulf %62, %73 : vector<16x128xf32>
    %c0_10 = arith.constant 0 : index
    %c0_11 = arith.constant 0 : index
    %75 = vector.load %arg2[%c0_10, %c0_11] : memref<16x16xf32, #tpu.memory_space<vmem>>, vector<16x16xf32>
    %cst_12 = arith.constant dense<0.000000e+00> : vector<16x128xf32>
    %76 = tpu.matmul %75, %74, %cst_12 {dimension_numbers = #tpu.dot_dimension_numbers<[1], [0], [0], [1], [0, 0, 1, 1], [], []>, precision = #tpu.contract_precision<fp32>} : vector<16x16xf32>, vector<16x128xf32>, vector<16x128xf32> -> vector<16x128xf32>
    %77 = arith.mulf %76, %76 : vector<16x128xf32>
    %cst_13 = arith.constant 2.000000e+00 : f32
    %78 = vector.broadcast %cst_13 : f32 to vector<16x1xf32>
    %79 = arith.mulf %78, %12 : vector<16x1xf32>
    %cst_14 = arith.constant 1.000000e+00 : f32
    %80 = vector.broadcast %cst_14 : f32 to vector<16x1xf32>
    %81 = arith.subf %80, %79 : vector<16x1xf32>
    %82 = vector.broadcast %81 : vector<16x1xf32> to vector<16x128xf32>
    %83 = arith.mulf %77, %82 : vector<16x128xf32>
    %cst_15 = arith.constant dense<0.000000e+00> : vector<128xf32>
    %84 = vector.multi_reduction <add>, %83, %cst_15 [0] : vector<16x128xf32> to vector<128xf32>
    %85 = vector.shape_cast %84 : vector<128xf32> to vector<1x128xf32>
    %c0_16 = arith.constant 0 : index
    %c0_17 = arith.constant 0 : index
    %86 = vector.load %arg3[%c0_16, %c0_17] : memref<4x128xf32, #tpu.memory_space<vmem>>, vector<1x128xf32>
    tpu.vector_store %arg3[%c0_16, %c0_17], %85 {strides = array<i32>} : memref<4x128xf32, #tpu.memory_space<vmem>>, vector<1x128xf32>,
    %cst_18 = arith.constant 2.000000e+00 : f32
    %87 = vector.broadcast %cst_18 : f32 to vector<16x1xf32>
    %88 = arith.mulf %87, %17 : vector<16x1xf32>
    %cst_19 = arith.constant 1.000000e+00 : f32
    %89 = vector.broadcast %cst_19 : f32 to vector<16x1xf32>
    %90 = arith.subf %89, %88 : vector<16x1xf32>
    %91 = vector.broadcast %90 : vector<16x1xf32> to vector<16x128xf32>
    %92 = arith.mulf %77, %91 : vector<16x128xf32>
    %cst_20 = arith.constant dense<0.000000e+00> : vector<128xf32>
    %93 = vector.multi_reduction <add>, %92, %cst_20 [0] : vector<16x128xf32> to vector<128xf32>
    %94 = vector.shape_cast %93 : vector<128xf32> to vector<1x128xf32>
    %c1 = arith.constant 1 : index
    %c0_21 = arith.constant 0 : index
    %95 = vector.load %arg3[%c1, %c0_21] : memref<4x128xf32, #tpu.memory_space<vmem>>, vector<1x128xf32>
    tpu.vector_store %arg3[%c1, %c0_21], %94 {strides = array<i32>} : memref<4x128xf32, #tpu.memory_space<vmem>>, vector<1x128xf32>,
    %cst_22 = arith.constant 2.000000e+00 : f32
    %96 = vector.broadcast %cst_22 : f32 to vector<16x1xf32>
    %97 = arith.mulf %96, %22 : vector<16x1xf32>
    %cst_23 = arith.constant 1.000000e+00 : f32
    %98 = vector.broadcast %cst_23 : f32 to vector<16x1xf32>
    %99 = arith.subf %98, %97 : vector<16x1xf32>
    %100 = vector.broadcast %99 : vector<16x1xf32> to vector<16x128xf32>
    %101 = arith.mulf %77, %100 : vector<16x128xf32>
    %cst_24 = arith.constant dense<0.000000e+00> : vector<128xf32>
    %102 = vector.multi_reduction <add>, %101, %cst_24 [0] : vector<16x128xf32> to vector<128xf32>
    %103 = vector.shape_cast %102 : vector<128xf32> to vector<1x128xf32>
    %c2 = arith.constant 2 : index
    %c0_25 = arith.constant 0 : index
    %104 = vector.load %arg3[%c2, %c0_25] : memref<4x128xf32, #tpu.memory_space<vmem>>, vector<1x128xf32>
    tpu.vector_store %arg3[%c2, %c0_25], %103 {strides = array<i32>} : memref<4x128xf32, #tpu.memory_space<vmem>>, vector<1x128xf32>,
    %cst_26 = arith.constant 2.000000e+00 : f32
    %105 = vector.broadcast %cst_26 : f32 to vector<16x1xf32>
    %106 = arith.mulf %105, %27 : vector<16x1xf32>
    %cst_27 = arith.constant 1.000000e+00 : f32
    %107 = vector.broadcast %cst_27 : f32 to vector<16x1xf32>
    %108 = arith.subf %107, %106 : vector<16x1xf32>
    %109 = vector.broadcast %108 : vector<16x1xf32> to vector<16x128xf32>
    %110 = arith.mulf %77, %109 : vector<16x128xf32>
    %cst_28 = arith.constant dense<0.000000e+00> : vector<128xf32>
    %111 = vector.multi_reduction <add>, %110, %cst_28 [0] : vector<16x128xf32> to vector<128xf32>
    %112 = vector.shape_cast %111 : vector<128xf32> to vector<1x128xf32>
    %c3 = arith.constant 3 : index
    %c0_29 = arith.constant 0 : index
    %113 = vector.load %arg3[%c3, %c0_29] : memref<4x128xf32, #tpu.memory_space<vmem>>, vector<1x128xf32>
    tpu.vector_store %arg3[%c3, %c0_29], %112 {strides = array<i32>} : memref<4x128xf32, #tpu.memory_space<vmem>>, vector<1x128xf32>,
    return
  }
  func.func @transform_0(%arg0: i32) -> (i32, i32) {
    %c0_i32 = arith.constant 0 : i32
    %c0_i32_0 = arith.constant 0 : i32
    return %c0_i32, %arg0 : i32, i32
  }
  func.func @transform_1(%arg0: i32) -> (i32, i32) {
    %c0_i32 = arith.constant 0 : i32
    %c0_i32_0 = arith.constant 0 : i32
    %c0_i32_1 = arith.constant 0 : i32
    return %c0_i32, %c0_i32_0 : i32, i32
  }
  func.func @transform_2(%arg0: i32) -> (i32, i32) {
    %c0_i32 = arith.constant 0 : i32
    %c0_i32_0 = arith.constant 0 : i32
    return %c0_i32, %arg0 : i32, i32
  }
}

</mosaic_0001>

<llo_original>
// kernel: qlayer_forward.1
$region0: #{qlayer_forward.1}
  #allocation0 [shape = 'u32[]', space=smem, size = 0x4, offset = 0x4, fixed_abs, tag = 'smem constant byte address 0x4 - core index']
  #allocation1 [shape = 'u32[72,128]{1,0:T(1,128)}', space=vmem, size = 0x9000, scoped, tag = 'internal scratch']
  %s0 = inlined_call_operand.vmem [shape: f32[4,128], index: 0, kind: input, shape index: {}]
  %s1 = inlined_call_operand.vmem [shape: f32[16,16], index: 1, kind: input, shape index: {}]
  %s2 = inlined_call_operand.vmem [shape: f32[4,128], index: 2, kind: output, shape index: {}]
  %s3 = sld [smem:[#allocation0]]
  $region18: #{qlayer_forward.1} parent=0
    _
  %s5 = ssub.s32 1, %s3
  %s6 = scalar_select 0, %s5, %s3
  // Predicated region
  $region2: #{qlayer_forward.1} parent=0 // pred_check
    _
  $region3: #{qlayer_forward.1} parent=0 // pred_check_branch
    %8 = sbr.rel (0) target = $region5
  $region4: #{qlayer_forward.1} parent=0 // pred_region
    _
  $region5: #{qlayer_forward.1} parent=0 // pred_fallthru
    _
  // Predicated region
  $region6: #{qlayer_forward.1} parent=0 // pred_check
    _
  $region7: #{qlayer_forward.1} parent=0 // pred_check_branch
    %10 = sbr.rel (0) target = $region9
  $region8: #{qlayer_forward.1} parent=0 // pred_region
    _
  $region9: #{qlayer_forward.1} parent=0 // pred_fallthru
    _
  %v11 = vld [vmem:[%s0] sm:$0xf]
  %v12 = vmul.f32 %v11, 0.5
  %v13 = vand.u32 2147483647, %v12
  %vm14 = vcmp.le.f32.partialorder %v13, 0.7853982
  %vm15 = vcmp.lt.s32.totalorder %v12, 0
  %v16 = vand.u32 %v12, 2139095040
  %v17 = vshrl.u32 %v16, 23
  %v18 = vsub.s32 %v17, 127
  %v19 = vand.u32 2147483647, %v12
  %v20 = vand.u32 %v19, 8388607
  %v21 = vor.u32 %v20, 8388608
  %v22 = vsub.s32 0, %v21
  %v23 = vadd.s32 %v18, 1
  %vm24 = vcmp.gt.s32.totalorder %v23, 0
  %v25 = vsel %vm24, %v23, 0
  %v26 = vshrl.u32 %v25, 5
  %v27 = vand.u32 %v25, 31
  %v28 = vsub.s32 32, %v27
  %v29 = vshrl.u32 683565275, %v28
  %v30 = vshll.u32 683565275, %v27
  %v31 = vshrl.u32 2475754826, %v28
  %v32 = vor.u32 %v30, %v31
  %v33 = vshll.u32 2475754826, %v27
  %v34 = vshrl.u32 2131351028, %v28
  %v35 = vor.u32 %v33, %v34
  %v36 = vshll.u32 2131351028, %v27
  %v37 = vshrl.u32 2102212464, %v28
  %v38 = vor.u32 %v36, %v37
  %v39 = vshll.u32 2102212464, %v27
  %v40 = vshrl.u32 920167782, %v28
  %v41 = vor.u32 %v39, %v40
  %v42 = vshll.u32 920167782, %v27
  %v43 = vshrl.u32 1326507024, %v28
  %v44 = vor.u32 %v42, %v43
  %vm45 = vcmp.lt.s32.totalorder %v26, 1
  %vm46 = vcmp.lt.s32.totalorder %v26, 2
  %vm47 = vcmp.lt.s32.totalorder %v26, 3
  %vm48 = vcmp.lt.s32.totalorder %v26, 4
  %v49 = vsel %vm45, %v29, %v32
  %v50 = vsel %vm48, %v38, 2102212464
  %v51 = vsel %vm47, %v35, %v50
  %v52 = vsel %vm46, %v49, %v51
  %v53 = vsel %vm45, %v32, %v35
  %v54 = vsel %vm48, %v41, 920167782
  %v55 = vsel %vm47, %v38, %v54
  %v56 = vsel %vm46, %v53, %v55
  %v57 = vsel %vm45, %v35, %v38
  %v58 = vsel %vm48, %v44, 1326507024
  %v59 = vsel %vm47, %v41, %v58
  %v60 = vsel %vm46, %v57, %v59
  %v61 = vshll.u32 %v21, 8
  %v62 = vand.u32 %v61, 65535
  %v63 = vshrl.u32 %v61, 16
  %v64 = vand.u32 %v60, 65535
  %v65 = vshrl.u32 %v60, 16
  %v66 = vmul.u32 %v62, %v64
  %v67 = vmul.u32 %v62, %v65
  %v68 = vmul.u32 %v63, %v64
  %v69 = vmul.u32 %v63, %v65
  %v70 = vshll.u32 %v67, 16
  %v71 = vshrl.u32 %v67, 16
  %v72 = vshll.u32 %v68, 16
  %v73 = vshrl.u32 %v68, 16
  %vm74 = vc.u32 %v66, %v70
  %v75 = vsel %vm74, 1, 0
  %v76 = vadd.s32 %v66, %v70
  %v77 = vadd.s32 %v69, %v75
  %vm78 = vc.u32 %v76, %v72
  %v79 = vsel %vm78, 1, 0
  %v80 = vadd.s32 %v76, %v72
  %v81 = vadd.s32 %v77, %v79
  %v82 = vadd.s32 %v81, %v71
  %v83 = vadd.s32 %v82, %v73
  %v84 = vand.u32 %v61, 65535
  %v85 = vshrl.u32 %v61, 16
  %v86 = vand.u32 %v56, 65535
  %v87 = vshrl.u32 %v56, 16
  %v88 = vmul.u32 %v84, %v86
  %v89 = vmul.u32 %v84, %v87
  %v90 = vmul.u32 %v85, %v86
  %v91 = vmul.u32 %v85, %v87
  %v92 = vshll.u32 %v89, 16
  %v93 = vshrl.u32 %v89, 16
  %v94 = vshll.u32 %v90, 16
  %v95 = vshrl.u32 %v90, 16
  %vm96 = vc.u32 %v88, %v92
  %v97 = vsel %vm96, 1, 0
  %v98 = vadd.s32 %v88, %v92
  %v99 = vadd.s32 %v91, %v97
  %vm100 = vc.u32 %v98, %v94
  %v101 = vsel %vm100, 1, 0
  %v102 = vadd.s32 %v98, %v94
  %v103 = vadd.s32 %v99, %v101
  %v104 = vadd.s32 %v103, %v93
  %v105 = vadd.s32 %v104, %v95
  %v106 = vmul.u32 %v61, %v52
  %v107 = vadd.s32 %v83, %v102
  %vm108 = vc.u32 %v83, %v102
  %v109 = vadd.s32 %v105, 1
  %v110 = vsel %vm108, %v109, %v105
  %v111 = vadd.s32 %v106, %v110
  %v112 = vadd.s32 %v111, 536870912
  %v113 = vshrl.u32 %v112, 30
  %v114 = vshll.u32 %v113, 30
  %v115 = vsub.s32 %v111, %v114
  %vm116 = vcmp.lt.s32.totalorder %v115, 0
  %v117 = vsub.s32 0, %v115
  %v118 = vsel %vm116, %v117, %v115
  %v119 = vclz %v118
  %v120 = vsub.s32 %v119, 2
  %vm121 = vcmp.gt.s32.totalorder 0, %v120
  %v122 = vsel %vm121, 0, %v120
  %v123 = vsub.s32 32, %v122
  %v124 = vshll.u32 %v115, %v122
  %v125 = vshrl.u32 %v107, %v123
  %v126 = vor.u32 %v124, %v125
  %v127 = vsub.s32 4294967266, %v122
  %v128 = vadd.s32 %v127, 127
  %v129 = vshll.u32 %v128, 23
  %v130 = vor.u32 4788187, %v129
  %v131 = vand.u32 2147483647, %v130
  %v133 = vcvt.s32.f32 %v126
  %v134 = vmul.f32 %v133, %v131
  %v135 = vxor.u32 %v134, 2147483648
  %v136 = vsel %vm15, %v135, %v134
  %v137 = vsub.s32 4, %v113
  %v138 = vsel %vm15, %v137, %v113
  %v139 = vsel %vm14, %v12, %v136
  %v140 = vsel %vm14, 0, %v138
  %v141 = vmul.f32 %v139, %v139
  %v142 = vmul.f32 %v141, -0.001358992
  %v143 = vadd.f32 %v142, 0.041655596
  %v144 = vmul.f32 %v141, %v143
  %v145 = vadd.f32 %v144, -0.4999988
  %v146 = vmul.f32 %v141, %v145
  %v147 = vadd.f32 1.0, %v146
  %v148 = vmul.f32 %v139, %v139
  %v149 = vmul.f32 %v148, -0.00019511016
  %v150 = vadd.f32 %v149, 0.008332121
  %v151 = vmul.f32 %v148, %v150
  %v152 = vadd.f32 %v151, -0.16666654
  %v153 = vmul.f32 %v148, %v152
  %v154 = vadd.f32 %v153, 1.0
  %v155 = vmul.f32 %v154, %v139
  %vm156 = vweird.f32 %v12
  %v157 = vand.u32 %v140, 3
  %vm158 = vcmp.lt.s32.totalorder %v157, 2
  %vm159 = vcmp.eq.s32.totalorder %v157, 0
  %v160 = vxor.u32 %v155, 2147483648
  %v161 = vsel %vm159, %v147, %v160
  %vm162 = vcmp.eq.s32.totalorder %v157, 2
  %v163 = vxor.u32 %v147, 2147483648
  %v164 = vsel %vm162, %v163, %v155
  %v165 = vsel %vm158, %v161, %v164
  %v166 = vsel %vm156, nan, %v165
  %v167 = vand.u32 2147483647, %v12
  %vm168 = vcmp.le.f32.partialorder %v167, 0.7853982
  %vm169 = vcmp.lt.s32.totalorder %v12, 0
  %v170 = vand.u32 %v12, 2139095040
  %v171 = vshrl.u32 %v170, 23
  %v172 = vsub.s32 %v171, 127
  %v173 = vand.u32 2147483647, %v12
  %v174 = vand.u32 %v173, 8388607
  %v175 = vor.u32 %v174, 8388608
  %v176 = vsub.s32 0, %v175
  %v177 = vadd.s32 %v172, 1
  %vm178 = vcmp.gt.s32.totalorder %v177, 0
  %v179 = vsel %vm178, %v177, 0
  %v180 = vshrl.u32 %v179, 5
  %v181 = vand.u32 %v179, 31
  %v182 = vsub.s32 32, %v181
  %v183 = vshrl.u32 683565275, %v182
  %v184 = vshll.u32 683565275, %v181
  %v185 = vshrl.u32 2475754826, %v182
  %v186 = vor.u32 %v184, %v185
  %v187 = vshll.u32 2475754826, %v181
  %v188 = vshrl.u32 2131351028, %v182
  %v189 = vor.u32 %v187, %v188
  %v190 = vshll.u32 2131351028, %v181
  %v191 = vshrl.u32 2102212464, %v182
  %v192 = vor.u32 %v190, %v191
  %v193 = vshll.u32 2102212464, %v181
  %v194 = vshrl.u32 920167782, %v182
  %v195 = vor.u32 %v193, %v194
  %v196 = vshll.u32 920167782, %v181
  %v197 = vshrl.u32 1326507024, %v182
  %v198 = vor.u32 %v196, %v197
  %vm199 = vcmp.lt.s32.totalorder %v180, 1
  %vm200 = vcmp.lt.s32.totalorder %v180, 2
  %vm201 = vcmp.lt.s32.totalorder %v180, 3
  %vm202 = vcmp.lt.s32.totalorder %v180, 4
  %v203 = vsel %vm199, %v183, %v186
  %v204 = vsel %vm202, %v192, 2102212464
  %v205 = vsel %vm201, %v189, %v204
  %v206 = vsel %vm200, %v203, %v205
  %v207 = vsel %vm199, %v186, %v189
  %v208 = vsel %vm202, %v195, 920167782
  %v209 = vsel %vm201, %v192, %v208
  %v210 = vsel %vm200, %v207, %v209
  %v211 = vsel %vm199, %v189, %v192
  %v212 = vsel %vm202, %v198, 1326507024
  %v213 = vsel %vm201, %v195, %v212
  %v214 = vsel %vm200, %v211, %v213
  %v215 = vshll.u32 %v175, 8
  %v216 = vand.u32 %v215, 65535
  %v217 = vshrl.u32 %v215, 16
  %v218 = vand.u32 %v214, 65535
  %v219 = vshrl.u32 %v214, 16
  %v220 = vmul.u32 %v216, %v218
  %v221 = vmul.u32 %v216, %v219
  %v222 = vmul.u32 %v217, %v218
  %v223 = vmul.u32 %v217, %v219
  %v224 = vshll.u32 %v221, 16
  %v225 = vshrl.u32 %v221, 16
  %v226 = vshll.u32 %v222, 16
  %v227 = vshrl.u32 %v222, 16
  %vm228 = vc.u32 %v220, %v224
  %v229 = vsel %vm228, 1, 0
  %v230 = vadd.s32 %v220, %v224
  %v231 = vadd.s32 %v223, %v229
  %vm232 = vc.u32 %v230, %v226
  %v233 = vsel %vm232, 1, 0
  %v234 = vadd.s32 %v230, %v226
  %v235 = vadd.s32 %v231, %v233
  %v236 = vadd.s32 %v235, %v225
  %v237 = vadd.s32 %v236, %v227
  %v238 = vand.u32 %v215, 65535
  %v239 = vshrl.u32 %v215, 16
  %v240 = vand.u32 %v210, 65535
  %v241 = vshrl.u32 %v210, 16
  %v242 = vmul.u32 %v238, %v240
  %v243 = vmul.u32 %v238, %v241
  %v244 = vmul.u32 %v239, %v240
  %v245 = vmul.u32 %v239, %v241
  %v246 = vshll.u32 %v243, 16
  %v247 = vshrl.u32 %v243, 16
  %v248 = vshll.u32 %v244, 16
  %v249 = vshrl.u32 %v244, 16
  %vm250 = vc.u32 %v242, %v246
  %v251 = vsel %vm250, 1, 0
  %v252 = vadd.s32 %v242, %v246
  %v253 = vadd.s32 %v245, %v251
  %vm254 = vc.u32 %v252, %v248
  %v255 = vsel %vm254, 1, 0
  %v256 = vadd.s32 %v252, %v248
  %v257 = vadd.s32 %v253, %v255
  %v258 = vadd.s32 %v257, %v247
  %v259 = vadd.s32 %v258, %v249
  %v260 = vmul.u32 %v215, %v206
  %v261 = vadd.s32 %v237, %v256
  %vm262 = vc.u32 %v237, %v256
  %v263 = vadd.s32 %v259, 1
  %v264 = vsel %vm262, %v263, %v259
  %v265 = vadd.s32 %v260, %v264
  %v266 = vadd.s32 %v265, 536870912
  %v267 = vshrl.u32 %v266, 30
  %v268 = vshll.u32 %v267, 30
  %v269 = vsub.s32 %v265, %v268
  %vm270 = vcmp.lt.s32.totalorder %v269, 0
  %v271 = vsub.s32 0, %v269
  %v272 = vsel %vm270, %v271, %v269
  %v273 = vclz %v272
  %v274 = vsub.s32 %v273, 2
  %vm275 = vcmp.gt.s32.totalorder 0, %v274
  %v276 = vsel %vm275, 0, %v274
  %v277 = vsub.s32 32, %v276
  %v278 = vshll.u32 %v269, %v276
  %v279 = vshrl.u32 %v261, %v277
  %v280 = vor.u32 %v278, %v279
  %v281 = vsub.s32 4294967266, %v276
  %v282 = vadd.s32 %v281, 127
  %v283 = vshll.u32 %v282, 23
  %v284 = vor.u32 4788187, %v283
  %v285 = vand.u32 2147483647, %v284
  %v287 = vcvt.s32.f32 %v280
  %v288 = vmul.f32 %v287, %v285
  %v289 = vxor.u32 %v288, 2147483648
  %v290 = vsel %vm169, %v289, %v288
  %v291 = vsub.s32 4, %v267
  %v292 = vsel %vm169, %v291, %v267
  %v293 = vsel %vm168, %v12, %v290
  %v294 = vsel %vm168, 0, %v292
  %v295 = vmul.f32 %v293, %v293
  %v296 = vmul.f32 %v295, -0.001358992
  %v297 = vadd.f32 %v296, 0.041655596
  %v298 = vmul.f32 %v295, %v297
  %v299 = vadd.f32 %v298, -0.4999988
  %v300 = vmul.f32 %v295, %v299
  %v301 = vadd.f32 1.0, %v300
  %v302 = vmul.f32 %v293, %v293
  %v303 = vmul.f32 %v302, -0.00019511016
  %v304 = vadd.f32 %v303, 0.008332121
  %v305 = vmul.f32 %v302, %v304
  %v306 = vadd.f32 %v305, -0.16666654
  %v307 = vmul.f32 %v302, %v306
  %v308 = vadd.f32 %v307, 1.0
  %v309 = vmul.f32 %v308, %v293
  %vm310 = vweird.f32 %v12
  %v311 = vadd.s32 %v294, 3
  %v312 = vand.u32 %v311, 3
  %vm313 = vcmp.lt.s32.totalorder %v312, 2
  %vm314 = vcmp.eq.s32.totalorder %v312, 0
  %v315 = vxor.u32 %v309, 2147483648
  %v316 = vsel %vm314, %v301, %v315
  %vm317 = vcmp.eq.s32.totalorder %v312, 2
  %v318 = vxor.u32 %v301, 2147483648
  %v319 = vsel %vm317, %v318, %v309
  %v320 = vsel %vm313, %v316, %v319
  %v321 = vsel %vm310, nan, %v320
  %v322 = vlaneseq
  %v323 = vshrl.u32 %v322, 7
  %v324 = vadd.s32 %v323, 8
  %v325 = vshra.s32 %v323, 3
  %v326 = vshra.s32 %v324, 3
  %v327 = vand.u32 %v325, 1
  %v328 = vand.u32 %v326, 1
  %v329 = vcvt.s32.f32 %v327
  %v330 = vcvt.s32.f32 %v328
  %v331 = vshra.s32 %v323, 2
  %v332 = vshra.s32 %v324, 2
  %v333 = vand.u32 %v331, 1
  %v334 = vand.u32 %v332, 1
  %v335 = vcvt.s32.f32 %v333
  %v336 = vcvt.s32.f32 %v334
  %v337 = vshra.s32 %v323, 1
  %v338 = vshra.s32 %v324, 1
  %v339 = vand.u32 %v337, 1
  %v340 = vand.u32 %v338, 1
  %v341 = vcvt.s32.f32 %v339
  %v342 = vcvt.s32.f32 %v340
  %v343 = vand.u32 %v323, 1
  %v344 = vand.u32 %v324, 1
  %v345 = vcvt.s32.f32 %v343
  %v346 = vcvt.s32.f32 %v344
  %v347 = vsub.f32 1.0, %v329
  %v348 = vsub.f32 1.0, %v330
  %v349 = vperm.slane %v166, 0
  %v350 = vmul.f32 %v349, %v347
  %v351 = vmul.f32 %v349, %v348
  %v352 = vperm.slane %v321, 0
  %v353 = vmul.f32 %v352, %v329
  %v354 = vmul.f32 %v352, %v330
  %v355 = vadd.f32 %v350, %v353
  %v356 = vadd.f32 %v351, %v354
  %v357 = vsub.f32 1.0, %v335
  %v358 = vsub.f32 1.0, %v336
  %v359 = vperm.slane %v166, 1
  %v360 = vmul.f32 %v359, %v357
  %v361 = vmul.f32 %v359, %v358
  %v362 = vperm.slane %v321, 1
  %v363 = vmul.f32 %v362, %v335
  %v364 = vmul.f32 %v362, %v336
  %v365 = vadd.f32 %v360, %v363
  %v366 = vadd.f32 %v361, %v364
  %v367 = vmul.f32 %v355, %v365
  %v368 = vmul.f32 %v356, %v366
  %v369 = vsub.f32 1.0, %v341
  %v370 = vsub.f32 1.0, %v342
  %v371 = vperm.slane %v166, 2
  %v372 = vmul.f32 %v371, %v369
  %v373 = vmul.f32 %v371, %v370
  %v374 = vperm.slane %v321, 2
  %v375 = vmul.f32 %v374, %v341
  %v376 = vmul.f32 %v374, %v342
  %v377 = vadd.f32 %v372, %v375
  %v378 = vadd.f32 %v373, %v376
  %v379 = vmul.f32 %v367, %v377
  %v380 = vmul.f32 %v368, %v378
  %v381 = vsub.f32 1.0, %v345
  %v382 = vsub.f32 1.0, %v346
  %v383 = vperm.slane %v166, 3
  %v384 = vmul.f32 %v383, %v381
  %v385 = vmul.f32 %v383, %v382
  %v386 = vperm.slane %v321, 3
  %v387 = vmul.f32 %v386, %v345
  %v388 = vmul.f32 %v386, %v346
  %v389 = vadd.f32 %v384, %v387
  %v390 = vadd.f32 %v385, %v388
  %v391 = vmul.f32 %v379, %v389
  %v392 = vmul.f32 %v380, %v390
  %v393 = vld [vmem:[%s1] sm:$0xff]
  %v394 = vld [vmem:[%s1 + $0x8] sm:$0xff]
  %vm395 = vcmask 130048
  %v397 = vsel %vm395, %v393, 0
  %v400 = vsel %vm395, %v394, 0
  %402 = vmatpush.msra.mxu0 0.0
  %403 = vmatpush.msra.mxu0 0.0
  %404 = vmatpush.msra.mxu0 0.0
  %405 = vmatpush.msra.mxu0 0.0
  %406 = vmatpush.msra.mxu0 0.0
  %407 = vmatpush.msra.mxu0 0.0
  %408 = vmatpush.msra.mxu0 0.0
  %409 = vmatpush.msra.mxu0 0.0
  %410 = vmatpush.msra.mxu0 0.0
  %411 = vmatpush.msra.mxu0 0.0
  %412 = vmatpush.msra.mxu0 0.0
  %413 = vmatpush.msra.mxu0 0.0
  %414 = vmatpush.msra.mxu0 0.0
  %415 = vmatpush.msra.mxu0 0.0
  %v416 = vand.u32 %v392, 4294901760
  %417 = vmatpush.msra.mxu0 %v416
  %v418 = vand.u32 %v391, 4294901760
  %419 = vmatpush.msra.mxu0 %v418
  %v420 = vand.u32 %v397, 4294901760
  %v421 = vsub.f32 %v397, %v420
  %v422 = vand.u32 %v421, 4294901760
  %v423 = vsub.f32 %v421, %v422
  %v424 = vand.u32 %v423, 4294901760
  %425 = vmatmul.f32.gmra.mxu0 %v424
  %v426 = vpop.f32.mrf.mxu0
  %v427 = vadd.f32 0.0, %v426
  %v428 = vand.u32 %v400, 4294901760
  %v429 = vsub.f32 %v400, %v428
  %v430 = vand.u32 %v429, 4294901760
  %v431 = vsub.f32 %v429, %v430
  %v432 = vand.u32 %v431, 4294901760
  %433 = vmatmul.f32.gmra.mxu0 %v432
  %v434 = vpop.f32.mrf.mxu0
  %v435 = vadd.f32 0.0, %v434
  %436 = vdwg.mxu0
  %437 = vmatpush.msra.mxu0 0.0
  %438 = vmatpush.msra.mxu0 0.0
  %439 = vmatpush.msra.mxu0 0.0
  %440 = vmatpush.msra.mxu0 0.0
  %441 = vmatpush.msra.mxu0 0.0
  %442 = vmatpush.msra.mxu0 0.0
  %443 = vmatpush.msra.mxu0 0.0
  %444 = vmatpush.msra.mxu0 0.0
  %445 = vmatpush.msra.mxu0 0.0
  %446 = vmatpush.msra.mxu0 0.0
  %447 = vmatpush.msra.mxu0 0.0
  %448 = vmatpush.msra.mxu0 0.0
  %449 = vmatpush.msra.mxu0 0.0
  %450 = vmatpush.msra.mxu0 0.0
  %v451 = vand.u32 %v392, 4294901760
  %v452 = vsub.f32 %v392, %v451
  %v453 = vand.u32 %v452, 4294901760
  %v454 = vsub.f32 %v452, %v453
  %v455 = vand.u32 %v454, 4294901760
  %456 = vmatpush.msra.mxu0 %v455
  %v457 = vand.u32 %v391, 4294901760
  %v458 = vsub.f32 %v391, %v457
  %v459 = vand.u32 %v458, 4294901760
  %v460 = vsub.f32 %v458, %v459
  %v461 = vand.u32 %v460, 4294901760
  %462 = vmatpush.msra.mxu0 %v461
  %v463 = vand.u32 %v397, 4294901760
  %464 = vmatmul.f32.gmra.mxu0 %v463
  %v465 = vpop.f32.mrf.mxu0
  %v466 = vadd.f32 %v427, %v465
  %v467 = vand.u32 %v400, 4294901760
  %468 = vmatmul.f32.gmra.mxu0 %v467
  %v469 = vpop.f32.mrf.mxu0
  %v470 = vadd.f32 %v435, %v469
  %471 = vdwg.mxu0
  %472 = vmatpush.msra.mxu0 0.0
  %473 = vmatpush.msra.mxu0 0.0
  %474 = vmatpush.msra.mxu0 0.0
  %475 = vmatpush.msra.mxu0 0.0
  %476 = vmatpush.msra.mxu0 0.0
  %477 = vmatpush.msra.mxu0 0.0
  %478 = vmatpush.msra.mxu0 0.0
  %479 = vmatpush.msra.mxu0 0.0
  %480 = vmatpush.msra.mxu0 0.0
  %481 = vmatpush.msra.mxu0 0.0
  %482 = vmatpush.msra.mxu0 0.0
  %483 = vmatpush.msra.mxu0 0.0
  %484 = vmatpush.msra.mxu0 0.0
  %485 = vmatpush.msra.mxu0 0.0
  %v486 = vand.u32 %v392, 4294901760
  %v487 = vsub.f32 %v392, %v486
  %488 = vmatpush.msra.mxu0 %v487
  %v489 = vand.u32 %v391, 4294901760
  %v490 = vsub.f32 %v391, %v489
  %491 = vmatpush.msra.mxu0 %v490
  %v492 = vand.u32 %v397, 4294901760
  %v493 = vsub.f32 %v397, %v492
  %494 = vmatmul.f32.gmra.mxu0 %v493
  %v495 = vpop.f32.mrf.mxu0
  %v496 = vadd.f32 %v466, %v495
  %v497 = vand.u32 %v400, 4294901760
  %v498 = vsub.f32 %v400, %v497
  %499 = vmatmul.f32.gmra.mxu0 %v498
  %v500 = vpop.f32.mrf.mxu0
  %v501 = vadd.f32 %v470, %v500
  %502 = vdwg.mxu0
  %503 = vmatpush.msra.mxu0 0.0
  %504 = vmatpush.msra.mxu0 0.0
  %505 = vmatpush.msra.mxu0 0.0
  %506 = vmatpush.msra.mxu0 0.0
  %507 = vmatpush.msra.mxu0 0.0
  %508 = vmatpush.msra.mxu0 0.0
  %509 = vmatpush.msra.mxu0 0.0
  %510 = vmatpush.msra.mxu0 0.0
  %511 = vmatpush.msra.mxu0 0.0
  %512 = vmatpush.msra.mxu0 0.0
  %513 = vmatpush.msra.mxu0 0.0
  %514 = vmatpush.msra.mxu0 0.0
  %515 = vmatpush.msra.mxu0 0.0
  %516 = vmatpush.msra.mxu0 0.0
  %v517 = vand.u32 %v392, 4294901760
  %518 = vmatpush.msra.mxu0 %v517
  %v519 = vand.u32 %v391, 4294901760
  %520 = vmatpush.msra.mxu0 %v519
  %v521 = vand.u32 %v397, 4294901760
  %v522 = vsub.f32 %v397, %v521
  %v523 = vand.u32 %v522, 4294901760
  %524 = vmatmul.f32.gmra.mxu0 %v523
  %v525 = vpop.f32.mrf.mxu0
  %v526 = vadd.f32 %v496, %v525
  %v527 = vand.u32 %v400, 4294901760
  %v528 = vsub.f32 %v400, %v527
  %v529 = vand.u32 %v528, 4294901760
  %530 = vmatmul.f32.gmra.mxu0 %v529
  %v531 = vpop.f32.mrf.mxu0
  %v532 = vadd.f32 %v501, %v531
  %533 = vdwg.mxu0
  %534 = vmatpush.msra.mxu0 0.0
  %535 = vmatpush.msra.mxu0 0.0
  %536 = vmatpush.msra.mxu0 0.0
  %537 = vmatpush.msra.mxu0 0.0
  %538 = vmatpush.msra.mxu0 0.0
  %539 = vmatpush.msra.mxu0 0.0
  %540 = vmatpush.msra.mxu0 0.0
  %541 = vmatpush.msra.mxu0 0.0
  %542 = vmatpush.msra.mxu0 0.0
  %543 = vmatpush.msra.mxu0 0.0
  %544 = vmatpush.msra.mxu0 0.0
  %545 = vmatpush.msra.mxu0 0.0
  %546 = vmatpush.msra.mxu0 0.0
  %547 = vmatpush.msra.mxu0 0.0
  %v548 = vand.u32 %v392, 4294901760
  %v549 = vsub.f32 %v392, %v548
  %v550 = vand.u32 %v549, 4294901760
  %551 = vmatpush.msra.mxu0 %v550
  %v552 = vand.u32 %v391, 4294901760
  %v553 = vsub.f32 %v391, %v552
  %v554 = vand.u32 %v553, 4294901760
  %555 = vmatpush.msra.mxu0 %v554
  %v556 = vand.u32 %v397, 4294901760
  %557 = vmatmul.f32.gmra.mxu0 %v556
  %v558 = vpop.f32.mrf.mxu0
  %v559 = vadd.f32 %v526, %v558
  %v560 = vand.u32 %v400, 4294901760
  %561 = vmatmul.f32.gmra.mxu0 %v560
  %v562 = vpop.f32.mrf.mxu0
  %v563 = vadd.f32 %v532, %v562
  %564 = vdwg.mxu0
  %565 = vmatpush.msra.mxu0 0.0
  %566 = vmatpush.msra.mxu0 0.0
  %567 = vmatpush.msra.mxu0 0.0
  %568 = vmatpush.msra.mxu0 0.0
  %569 = vmatpush.msra.mxu0 0.0
  %570 = vmatpush.msra.mxu0 0.0
  %571 = vmatpush.msra.mxu0 0.0
  %572 = vmatpush.msra.mxu0 0.0
  %573 = vmatpush.msra.mxu0 0.0
  %574 = vmatpush.msra.mxu0 0.0
  %575 = vmatpush.msra.mxu0 0.0
  %576 = vmatpush.msra.mxu0 0.0
  %577 = vmatpush.msra.mxu0 0.0
  %578 = vmatpush.msra.mxu0 0.0
  %v579 = vand.u32 %v392, 4294901760
  %580 = vmatpush.msra.mxu0 %v579
  %v581 = vand.u32 %v391, 4294901760
  %582 = vmatpush.msra.mxu0 %v581
  %v583 = vand.u32 %v397, 4294901760
  %584 = vmatmul.f32.gmra.mxu0 %v583
  %v585 = vpop.f32.mrf.mxu0
  %v586 = vadd.f32 %v559, %v585
  %v587 = vand.u32 %v400, 4294901760
  %588 = vmatmul.f32.gmra.mxu0 %v587
  %v589 = vpop.f32.mrf.mxu0
  %v590 = vadd.f32 %v563, %v589
  %591 = vdwg.mxu0
  %v592 = vmul.f32 %v586, %v586
  %v593 = vmul.f32 %v590, %v590
  %v594 = vmul.f32 %v329, 2.0
  %v595 = vmul.f32 %v330, 2.0
  %v596 = vsub.f32 1.0, %v594
  %v597 = vsub.f32 1.0, %v595
  %v598 = vmul.f32 %v592, %v596
  %v599 = vmul.f32 %v593, %v597
  %v600 = vadd.f32 %v598, %v599
  %v601 = vrot.slane %v600, 4
  %v602 = vadd.f32 %v600, %v601
  %v603 = vrot.slane %v602, 2
  %v604 = vadd.f32 %v602, %v603
  %v605 = vrot.slane %v604, 1
  %v606 = vadd.f32 %v604, %v605
  %607 = vst [vmem:[%s2] sm:$0x1] %v606
  %v608 = vmul.f32 %v335, 2.0
  %v609 = vmul.f32 %v336, 2.0
  %v610 = vsub.f32 1.0, %v608
  %v611 = vsub.f32 1.0, %v609
  %v612 = vmul.f32 %v592, %v610
  %v613 = vmul.f32 %v593, %v611
  %v614 = vadd.f32 %v612, %v613
  %v615 = vrot.slane %v614, 4
  %v616 = vadd.f32 %v614, %v615
  %v617 = vrot.slane %v616, 2
  %v618 = vadd.f32 %v616, %v617
  %v619 = vrot.slane %v618, 1
  %v620 = vadd.f32 %v618, %v619
  %621 = vst [vmem:[%s2 + $0x1] sm:$0x1] %v620
  %v622 = vmul.f32 %v341, 2.0
  %v623 = vmul.f32 %v342, 2.0
  %v624 = vsub.f32 1.0, %v622
  %v625 = vsub.f32 1.0, %v623
  %v626 = vmul.f32 %v592, %v624
  %v627 = vmul.f32 %v593, %v625
  %v628 = vadd.f32 %v626, %v627
  %v629 = vrot.slane %v628, 4
  %v630 = vadd.f32 %v628, %v629
  %v631 = vrot.slane %v630, 2
  %v632 = vadd.f32 %v630, %v631
  %v633 = vrot.slane %v632, 1
  %v634 = vadd.f32 %v632, %v633
  %635 = vst [vmem:[%s2 + $0x2] sm:$0x1] %v634
  %v636 = vmul.f32 %v345, 2.0
  %v637 = vmul.f32 %v346, 2.0
  %v638 = vsub.f32 1.0, %v636
  %v639 = vsub.f32 1.0, %v637
  %v640 = vmul.f32 %v592, %v638
  %v641 = vmul.f32 %v593, %v639
  %v642 = vadd.f32 %v640, %v641
  %v643 = vrot.slane %v642, 4
  %v644 = vadd.f32 %v642, %v643
  %v645 = vrot.slane %v644, 2
  %v646 = vadd.f32 %v644, %v645
  %v647 = vrot.slane %v646, 1
  %v648 = vadd.f32 %v646, %v647
  %649 = vst [vmem:[%s2 + $0x3] sm:$0x1] %v648
  // Predicated region
  $region10: #{qlayer_forward.1} parent=0 // pred_check
    _
  $region11: #{qlayer_forward.1} parent=0 // pred_check_branch
    %651 = sbr.rel (0) target = $region13
  $region12: #{qlayer_forward.1} parent=0 // pred_region
    _
  $region13: #{qlayer_forward.1} parent=0 // pred_fallthru
    _
  // Predicated region
  $region14: #{qlayer_forward.1} parent=0 // pred_check
    _
  $region15: #{qlayer_forward.1} parent=0 // pred_check_branch
    %653 = sbr.rel (0) target = $region17
  $region16: #{qlayer_forward.1} parent=0 // pred_region
    _
  $region17: #{qlayer_forward.1} parent=0 // pred_fallthru
    _

</llo_original>
